<compile_context>
chip_gen: v6e
topology: v6e:2x2x1
jax: 0.10.0
libtpu: 0.0.40
codegen_flags: <defaults>
</compile_context>

<pallas_src>
import functools

import jax
import jax.numpy as jnp
from jax.experimental import pallas as pl
from jax.experimental.pallas import tpu as pltpu

_LANES = 128
_SUBLANES = 8
_BETA = 1.0  # PyTorch nn.SmoothL1Loss default


def _huber(d):
    ad = jnp.abs(d)
    return jnp.where(ad < _BETA, (0.5 / _BETA) * (d * d), ad - 0.5 * _BETA)


def _smooth_l1_partial_kernel(p_ref, t_ref, o_ref, *, tile_rows, rows_valid,
                              needs_mask):
    # p_ref, t_ref: (TR, 128) tiles of the flattened inputs.
    # o_ref:        (1, 8, 128) per-chunk partial sum (lane/sublane-wise).
    p = p_ref[...].astype(jnp.float32)
    t = t_ref[...].astype(jnp.float32)
    loss = _huber(p - t)

    if needs_mask:
        # Last block of the grid only partially covers the array; rows past
        # `rows_valid` hold unspecified VMEM data -> zero them before the
        # reduction.  Pure VALU work, hidden under the HBM-bound pipeline.
        row0 = pl.program_id(0) * tile_rows
        row_ids = row0 + jax.lax.broadcasted_iota(jnp.int32, loss.shape, 0)
        loss = jnp.where(row_ids < rows_valid, loss, 0.0)

    # Reduce groups of 8 sublanes with plain VALU adds (no XLU in the hot
    # path); the reshape matches the (8,128) vreg tiling so it is free.
    partial = loss.reshape(tile_rows // _SUBLANES, _SUBLANES, _LANES).sum(axis=0)
    o_ref[...] = partial.reshape(1, _SUBLANES, _LANES)


def smooth_l1_loss(predict, target, *, max_rows_per_tile=2048):
    """Pallas SmoothL1Loss: mean Huber loss (beta=1.0) over all elements."""
    assert predict.shape == target.shape, (predict.shape, target.shape)
    n_total = predict.size

    p_flat = predict.reshape(-1)
    t_flat = target.reshape(-1)

    rows = n_total // _LANES          # full 128-lane rows
    n_main = rows * _LANES
    n_tail = n_total - n_main         # < 128 leftover elements

    total = jnp.float32(0.0)

    if rows > 0:
        # Lane-dense 2D view.  When n_tail == 0 (the common NN case) the
        # slice is a no-op and the reshape is a free metadata change, so the
        # kernel reads the original buffers with no extra HBM traffic.
        p2 = p_flat[:n_main].reshape(rows, _LANES)
        t2 = t_flat[:n_main].reshape(rows, _LANES)

        # Tile size: as large as allowed (amortizes per-step overhead) but
        # never bigger than the problem; always a multiple of 8 sublanes.
        tr = min(max_rows_per_tile, -(-rows // _SUBLANES) * _SUBLANES)
        tr = max(_SUBLANES, (tr // _SUBLANES) * _SUBLANES)

        num_chunks = -(-rows // tr)
        needs_mask = (rows % tr) != 0  # static (trace-time) decision

        kernel = functools.partial(
            _smooth_l1_partial_kernel,
            tile_rows=tr,
            rows_valid=rows,
            needs_mask=needs_mask,
        )

        partials = pl.pallas_call(
            kernel,
            out_shape=jax.ShapeDtypeStruct(
                (num_chunks, _SUBLANES, _LANES), jnp.float32
            ),
            grid_spec=pltpu.PrefetchScalarGridSpec(
                num_scalar_prefetch=0,
                grid=(num_chunks,),
                in_specs=[
                    pl.BlockSpec((tr, _LANES), lambda k: (k, 0)),
                    pl.BlockSpec((tr, _LANES), lambda k: (k, 0)),
                ],
                out_specs=pl.BlockSpec(
                    (1, _SUBLANES, _LANES), lambda k: (k, 0, 0)
                ),
            ),
            compiler_params=pltpu.CompilerParams(
                # Independent chunks: shardable across TensorCores (v7x).
                dimension_semantics=("parallel",),
            ),
        )(p2, t2)

        # Final (tiny) cross-lane reduction in plain JAX.
        total = total + jnp.sum(partials, dtype=jnp.float32)

    if n_tail > 0:
        # Sub-128-element tail: cheaper to handle in plain JAX than to pad
        # (and thus copy) the whole flattened arrays in HBM.
        dp = (p_flat[n_main:].astype(jnp.float32)
              - t_flat[n_main:].astype(jnp.float32))
        total = total + jnp.sum(_huber(dp), dtype=jnp.float32)

    mean = total / jnp.float32(n_total)
    return mean.astype(predict.dtype)


if __name__ == "__main__":
    key = jax.random.PRNGKey(0)
    kp, kt = jax.random.split(key)

    B, C, H, W = 2, 4, 16, 16
    predict = jax.random.normal(kp, (B, C, H, W), dtype=jnp.float32)
    target = jax.random.normal(kt, (B, C, H, W), dtype=jnp.float32)

    out = smooth_l1_loss(predict, target)
    out = jax.block_until_ready(out)

    # Reference (plain JAX): PyTorch SmoothL1Loss, beta=1.0, reduction='mean'.
    d = predict - target
    ad = jnp.abs(d)
    ref = jnp.mean(jnp.where(ad < 1.0, 0.5 * d * d, ad - 0.5))

    assert out.shape == ()
    assert jnp.allclose(out, ref, rtol=1e-5, atol=1e-6), (out, ref)

    print("KERNEL_OK")
</pallas_src>

<mosaic_0001>
module attributes {stable_mosaic.version = 11 : i64} {
  func.func @_smooth_l1_partial_kernel(%arg0: i32, %arg1: memref<16x128xf32, #tpu.memory_space<vmem>>, %arg2: memref<16x128xf32, #tpu.memory_space<vmem>>, %arg3: memref<1x8x128xf32, #tpu.memory_space<vmem>>) attributes {dimension_semantics = [#tpu.dimension_semantics<parallel>], iteration_bounds = array<i64: 1>, scalar_prefetch = 0 : i64, scratch_operands = 0 : i64, tpu.core_type = #tpu.core_type<tc>, window_params = [{transform_indices = @transform_0, window_bounds = array<i64: 16, 128>}, {transform_indices = @transform_1, window_bounds = array<i64: 16, 128>}, {transform_indices = @transform_2, window_bounds = array<i64: 1, 8, 128>}]} {
    %c0 = arith.constant 0 : index
    %c0_0 = arith.constant 0 : index
    %0 = vector.load %arg1[%c0, %c0_0] : memref<16x128xf32, #tpu.memory_space<vmem>>, vector<16x128xf32>
    %c0_1 = arith.constant 0 : index
    %c0_2 = arith.constant 0 : index
    %1 = vector.load %arg2[%c0_1, %c0_2] : memref<16x128xf32, #tpu.memory_space<vmem>>, vector<16x128xf32>
    %2 = arith.subf %0, %1 : vector<16x128xf32>
    %3 = math.absf %2 : vector<16x128xf32>
    %cst = arith.constant 1.000000e+00 : f32
    %4 = vector.broadcast %cst : f32 to vector<16x128xf32>
    %5 = arith.cmpf olt, %3, %4 : vector<16x128xf32>
    %6 = arith.mulf %2, %2 : vector<16x128xf32>
    %cst_3 = arith.constant 5.000000e-01 : f32
    %7 = vector.broadcast %cst_3 : f32 to vector<16x128xf32>
    %8 = arith.mulf %7, %6 : vector<16x128xf32>
    %cst_4 = arith.constant 5.000000e-01 : f32
    %9 = vector.broadcast %cst_4 : f32 to vector<16x128xf32>
    %10 = arith.subf %3, %9 : vector<16x128xf32>
    %11 = arith.select %5, %8, %10 : vector<16x128xi1>, vector<16x128xf32>
    %12 = vector.shape_cast %11 : vector<16x128xf32> to vector<2x8x128xf32>
    %cst_5 = arith.constant dense<0.000000e+00> : vector<8x128xf32>
    %13 = vector.multi_reduction <add>, %12, %cst_5 [0] : vector<2x8x128xf32> to vector<8x128xf32>
    %14 = vector.shape_cast %13 : vector<8x128xf32> to vector<1x8x128xf32>
    %c0_6 = arith.constant 0 : index
    %c0_7 = arith.constant 0 : index
    %c0_8 = arith.constant 0 : index
    %15 = vector.load %arg3[%c0_6, %c0_7, %c0_8] : memref<1x8x128xf32, #tpu.memory_space<vmem>>, vector<1x8x128xf32>
    tpu.vector_store %arg3[%c0_6, %c0_7, %c0_8], %14 {strides = array<i32>} : memref<1x8x128xf32, #tpu.memory_space<vmem>>, vector<1x8x128xf32>,
    return
  }
  func.func @transform_0(%arg0: i32) -> (i32, i32) {
    %c0_i32 = arith.constant 0 : i32
    %c0_i32_0 = arith.constant 0 : i32
    return %arg0, %c0_i32 : i32, i32
  }
  func.func @transform_1(%arg0: i32) -> (i32, i32) {
    %c0_i32 = arith.constant 0 : i32
    %c0_i32_0 = arith.constant 0 : i32
    return %arg0, %c0_i32 : i32, i32
  }
  func.func @transform_2(%arg0: i32) -> (i32, i32, i32) {
    %c0_i32 = arith.constant 0 : i32
    %c0_i32_0 = arith.constant 0 : i32
    %c0_i32_1 = arith.constant 0 : i32
    return %arg0, %c0_i32, %c0_i32_0 : i32, i32, i32
  }
}

</mosaic_0001>

<llo_original>
// kernel: tpu_custom_call.1
$region0: #{tpu_custom_call.1}
  #allocation0 [shape = 'u32[]', space=smem, size = 0x4, offset = 0x4, fixed_abs, tag = 'smem constant byte address 0x4 - core index']
  #allocation1 [shape = 'u32[144,128]{1,0:T(1,128)}', space=vmem, size = 0x12000, scoped, tag = 'internal scratch']
  %s0 = inlined_call_operand.hbm [shape: f32[16,128], index: 0, kind: input, shape index: {}]
  %s1 = inlined_call_operand.hbm [shape: f32[16,128], index: 1, kind: input, shape index: {}]
  %s2 = inlined_call_operand.hbm [shape: f32[1,8,128], index: 2, kind: output, shape index: {}]
  %s3 = sld [smem:[#allocation0]]
  $region26: #{tpu_custom_call.1} parent=0
    _
  %s5 = ssub.s32 1, %s3
  %s6 = scalar_select 0, %s5, %s3
  $region1: #{tpu_custom_call.1} parent=0
    #allocation2 [shape = 'u8[8192]{0}', space=vmem, size = 0x2000, scoped, tag = 'input window, operand 0, single buffered']
    #allocation3 [shape = 's32[1]{0}', space=sflag, size = 0x4, scoped, tag = 'scoped memory for tpu_custom_call.1']
    #allocation4 [shape = 's32[1]{0}', space=sflag, size = 0x4, scoped, tag = 'scoped memory for tpu_custom_call.1']
    #allocation5 [shape = 'u8[8192]{0}', space=vmem, size = 0x2000, scoped, tag = 'input window, operand 1, single buffered']
    #allocation6 [shape = 's32[1]{0}', space=sflag, size = 0x4, scoped, tag = 'scoped memory for tpu_custom_call.1']
    #allocation7 [shape = 'u8[4096]{0}', space=vmem, size = 0x1000, scoped, tag = 'output window, operand 0, single buffered']
    %7 = vsyncpa [#allocation3], 0
    %8 = vsyncpa [#allocation6], 0
    %9 = vsyncpa [#allocation4], 0
    // Predicated region
    $region2: #{tpu_custom_call.1} parent=1 // pred_check
      _
    $region3: #{tpu_custom_call.1} parent=1 // pred_check_branch
      %11 = sbr.rel (0) target = $region5
    $region4: #{tpu_custom_call.1} parent=1 // pred_region
      %s13 = ssub.s32 256, 256
      %14 = vsyncadd [#allocation3], %s13
      %s15 = sshll.u32 [#allocation2], 4
      %s16 = int_to_ptr.vmem [resolvable:$true] %s15
      %21 = dma.hbm_to_vmem [thread:$0]  %s0, 256, %s16, [#allocation3], 128, 128, 8
    $region5: #{tpu_custom_call.1} parent=1 // pred_fallthru
      _
    // Predicated region
    $region6: #{tpu_custom_call.1} parent=1 // pred_check
      _
    $region7: #{tpu_custom_call.1} parent=1 // pred_check_branch
      %23 = sbr.rel (0) target = $region9
    $region8: #{tpu_custom_call.1} parent=1 // pred_region
      %s25 = ssub.s32 256, 256
      %26 = vsyncadd [#allocation6], %s25
      %s27 = sshll.u32 [#allocation5], 4
      %s28 = int_to_ptr.vmem [resolvable:$true] %s27
      %33 = dma.hbm_to_vmem [thread:$0]  %s1, 256, %s28, [#allocation6], 128, 128, 8
    $region9: #{tpu_custom_call.1} parent=1 // pred_fallthru
      _
    // Predicated region
    $region10: #{tpu_custom_call.1} parent=1 // pred_check
      _
    $region11: #{tpu_custom_call.1} parent=1 // pred_check_branch
      %35 = sbr.rel (0) target = $region13
    $region12: #{tpu_custom_call.1} parent=1 // pred_region
      %36 = dma.done [#allocation3], 256
    $region13: #{tpu_custom_call.1} parent=1 // pred_fallthru
      _
    // Predicated region
    $region14: #{tpu_custom_call.1} parent=1 // pred_check
      _
    $region15: #{tpu_custom_call.1} parent=1 // pred_check_branch
      %38 = sbr.rel (0) target = $region17
    $region16: #{tpu_custom_call.1} parent=1 // pred_region
      %39 = dma.done [#allocation6], 256
    $region17: #{tpu_custom_call.1} parent=1 // pred_fallthru
      _
    %v40 = vld [vmem:[#allocation2] sm:$0xff]
    %v41 = vld [vmem:[#allocation2 + $0x8] sm:$0xff]
    %v42 = vld [vmem:[#allocation5] sm:$0xff]
    %v43 = vld [vmem:[#allocation5 + $0x8] sm:$0xff]
    %v44 = vsub.f32 %v40, %v42
    %v45 = vsub.f32 %v41, %v43
    %v46 = vand.u32 2147483647, %v44
    %v47 = vand.u32 2147483647, %v45
    %vm48 = vcmp.lt.f32.partialorder %v46, 1.0
    %vm49 = vcmp.lt.f32.partialorder %v47, 1.0
    %v50 = vmul.f32 %v44, %v44
    %v51 = vmul.f32 %v45, %v45
    %v52 = vmul.f32 %v50, 0.5
    %v53 = vmul.f32 %v51, 0.5
    %v54 = vsub.f32 %v46, 0.5
    %v55 = vsub.f32 %v47, 0.5
    %v56 = vsel %vm48, %v52, %v54
    %v57 = vsel %vm49, %v53, %v55
    %v58 = vadd.f32 %v56, %v57
    %59 = vst [vmem:[#allocation7] sm:$0xff] %v58
    // Predicated region
    $region18: #{tpu_custom_call.1} parent=1 // pred_check
      _
    $region19: #{tpu_custom_call.1} parent=1 // pred_check_branch
      %61 = sbr.rel (0) target = $region21
    $region20: #{tpu_custom_call.1} parent=1 // pred_region
      %s63 = ssub.s32 128, 128
      %64 = vsyncadd [#allocation4], %s63
      %s66 = sshll.u32 [#allocation7], 4
      %s67 = int_to_ptr.vmem [resolvable:$true] %s66
      %69 = dma.vmem_to_hbm [thread:$0]  %s67, 128, %s2, [#allocation4]
    $region21: #{tpu_custom_call.1} parent=1 // pred_fallthru
      _
    // Predicated region
    $region22: #{tpu_custom_call.1} parent=1 // pred_check
      _
    $region23: #{tpu_custom_call.1} parent=1 // pred_check_branch
      %71 = sbr.rel (0) target = $region25
    $region24: #{tpu_custom_call.1} parent=1 // pred_region
      %72 = dma.done [#allocation4], 128
    $region25: #{tpu_custom_call.1} parent=1 // pred_fallthru
      _
    %73 = vsyncpa [#allocation3], 1
    %74 = vsyncpa [#allocation6], 1
    %75 = vsyncpa [#allocation4], 1

</llo_original>
